<compile_context>
chip_gen: v6e
topology: v6e:2x2x1
jax: 0.10.0
libtpu: 0.0.40
codegen_flags: <defaults>
</compile_context>

<pallas_src>
import numpy as np
import jax
import jax.numpy as jnp
from jax.experimental import pallas as pl
from jax.experimental.pallas import tpu as pltpu


def _adaptive_bins(in_size, out_size):
    # PyTorch adaptive pooling bin boundaries.
    idx = np.arange(out_size)
    starts = (idx * in_size) // out_size
    ends = -((-(idx + 1) * in_size) // out_size)        # ceil((i+1)*in/out)
    return starts, ends


def _tpu_config():
    """Per-generation tiling / VMEM-budget knobs (conservative fallback)."""
    kind = ""
    try:
        kind = (jax.devices()[0].device_kind or "").lower()
    except Exception:
        pass
    if "v7" in kind:
        # 64 MiB physical VMEM, 3.2 TB/s HBM, 2 TensorCores/chip.
        return dict(target_tile_bytes=10 << 20, vmem_limit_bytes=44 << 20,
                    num_tensorcores=2)
    if "v6" in kind:
        # 128 MiB physical VMEM.
        return dict(target_tile_bytes=12 << 20, vmem_limit_bytes=64 << 20,
                    num_tensorcores=1)
    if "v5" in kind and ("lite" in kind or "5e" in kind):
        # v5e: 16 MiB default scoped limit -> raise explicitly.
        return dict(target_tile_bytes=6 << 20, vmem_limit_bytes=32 << 20,
                    num_tensorcores=1)
    # Unknown chip: stay inside the smallest default scoped-VMEM budget.
    return dict(target_tile_bytes=4 << 20, vmem_limit_bytes=None,
                num_tensorcores=1)


def _padded_tile_bytes(n_tile, C, lanes, itemsize):
    # Actual VMEM footprint: sublane dim padded to 8, lane dim padded to 128.
    c_pad = ((C + 7) // 8) * 8
    l_pad = ((lanes + 127) // 128) * 128
    return n_tile * c_pad * l_pad * itemsize


def _fit_n_tile(n_tile, C, itemsize, target_bytes):
    # Even a single 128-lane group must fit the per-tile budget; otherwise
    # shrink the batch tile so double-buffering survives for large C.
    while n_tile > 1 and _padded_tile_bytes(n_tile, C, 128, itemsize) > target_bytes:
        n_tile //= 2
    # TODO(synk): for C so large that a (1, C, 128) tile alone exceeds the
    # budget, add a tiled-C grid axis with per-C-block partial matmul outputs.
    return max(1, n_tile)


def _choose_hw_tile(HW, n_tile, C, itemsize, target_bytes):
    # Largest lane-aligned (multiple-of-128) HW tile whose *padded* VMEM
    # footprint fits the per-tile budget; full-extent block if HW fits.
    bytes_per_group = _padded_tile_bytes(n_tile, C, 128, itemsize)
    max_groups = max(1, target_bytes // max(1, bytes_per_group))
    t = min(HW, max_groups * 128)
    if t >= HW:
        return HW                                       # full-extent block is always legal
    return max(128, (t // 128) * 128)


def global_ave_pool(x, final_channels, *, target_tile_bytes=None):
    """x: (N, C, H, W) any float dtype -> (N, final_channels) in x.dtype."""
    N, C, H, W = x.shape
    HW = H * W
    FC = final_channels

    cfg = _tpu_config()
    if target_tile_bytes is None:
        target_tile_bytes = cfg["target_tile_bytes"]
    vmem_limit = cfg["vmem_limit_bytes"]

    # (C, FC) averaging matrix: P[c, i] = 1/((end_i-start_i)*HW) if c in bin i.
    starts, ends = _adaptive_bins(C, FC)
    pool = np.zeros((C, FC), dtype=np.float32)
    for i in range(FC):
        s, e = int(starts[i]), int(ends[i])
        pool[s:e, i] = 1.0 / ((e - s) * HW)
    pool = jnp.asarray(pool)

    # Native dtype: no wrapper-side upcast (would double HBM traffic for bf16).
    x_flat = x.reshape(N, C, HW)
    itemsize = x.dtype.itemsize

    n_tile = min(N, 8)
    if cfg["num_tensorcores"] >= 2 and N >= 2:
        # Megacore (v7x): ensure >= 2 steps on the "parallel" batch axis.
        n_tile = min(n_tile, max(1, N // 2))
    n_tile = _fit_n_tile(n_tile, C, itemsize, target_tile_bytes)

    t_hw = _choose_hw_tile(HW, n_tile, C, itemsize, target_tile_bytes)
    n_grid = pl.cdiv(N, n_tile)
    hw_grid = pl.cdiv(HW, t_hw)
    ragged_hw = (HW % t_hw) != 0

    out_shape = jax.ShapeDtypeStruct((N, FC), x.dtype)

    # ---- Single-pass case: whole HW row fits one tile (common CNN tail). ----
    if hw_grid == 1:
        def kernel_single(x_ref, pool_ref, o_ref):
            s = jnp.sum(x_ref[...].astype(jnp.float32), axis=-1)   # (n_tile, C)
            o_ref[...] = jnp.dot(s, pool_ref[...],
                                 preferred_element_type=jnp.float32
                                 ).astype(o_ref.dtype)

        return pl.pallas_call(
            kernel_single,
            out_shape=out_shape,
            grid=(n_grid,),
            in_specs=[
                pl.BlockSpec((n_tile, C, HW), lambda n: (n, 0, 0)),
                pl.BlockSpec((C, FC), lambda n: (0, 0)),
            ],
            out_specs=pl.BlockSpec((n_tile, FC), lambda n: (n, 0)),
            compiler_params=pltpu.CompilerParams(
                dimension_semantics=("parallel",),
                vmem_limit_bytes=vmem_limit),
        )(x_flat, pool)

    # ---- Streaming-reduction case: accumulate partial spatial sums. ----
    def kernel(x_ref, pool_ref, o_ref, acc_ref):
        hw_step = pl.program_id(1)
        last = pl.num_programs(1) - 1

        @pl.when(hw_step == 0)
        def _():
            acc_ref[...] = jnp.zeros_like(acc_ref)

        if ragged_hw:
            # Only the final (partial) tile pays for the mask.
            @pl.when(hw_step != last)
            def _():
                acc_ref[...] += jnp.sum(x_ref[...].astype(jnp.float32), axis=-1)

            @pl.when(hw_step == last)
            def _():
                xv = x_ref[...].astype(jnp.float32)
                col = jax.lax.broadcasted_iota(jnp.int32, xv.shape, xv.ndim - 1)
                xv = jnp.where(hw_step * t_hw + col < HW, xv, 0.0)
                acc_ref[...] += jnp.sum(xv, axis=-1)
        else:
            acc_ref[...] += jnp.sum(x_ref[...].astype(jnp.float32), axis=-1)

        @pl.when(hw_step == last)
        def _():
            o_ref[...] = jnp.dot(acc_ref[...], pool_ref[...],
                                 preferred_element_type=jnp.float32
                                 ).astype(o_ref.dtype)

    return pl.pallas_call(
        kernel,
        out_shape=out_shape,
        grid=(n_grid, hw_grid),
        in_specs=[
            pl.BlockSpec((n_tile, C, t_hw), lambda n, k: (n, 0, k)),
            pl.BlockSpec((C, FC), lambda n, k: (0, 0)),   # resident in VMEM
        ],
        out_specs=pl.BlockSpec((n_tile, FC), lambda n, k: (n, 0)),
        scratch_shapes=[pltpu.VMEM((n_tile, C), jnp.float32)],
        compiler_params=pltpu.CompilerParams(
            dimension_semantics=("parallel", "arbitrary"),
            vmem_limit_bytes=vmem_limit),
    )(x_flat, pool)


def _reference(x, final_channels):
    # Pure-JAX reference of AdaptiveAvgPool3d((FC,1,1)) + Flatten on NCHW input.
    N, C, H, W = x.shape
    starts, ends = _adaptive_bins(C, final_channels)
    xf = x.astype(jnp.float32)
    outs = []
    for i in range(final_channels):
        s, e = int(starts[i]), int(ends[i])
        outs.append(jnp.mean(xf[:, s:e, :, :], axis=(1, 2, 3)))
    return jnp.stack(outs, axis=1)


if __name__ == "__main__":
    key = jax.random.PRNGKey(0)
    k1, k2, k3 = jax.random.split(key, 3)

    # Case 1: aligned shapes (C divisible by FC), single-pass path (HW=256).
    N, C, H, W, FC = 2, 16, 16, 16, 4
    x1 = jax.random.normal(k1, (N, C, H, W), dtype=jnp.float32)
    out1 = jax.block_until_ready(global_ave_pool(x1, FC))
    ref1 = _reference(x1, FC)
    assert out1.shape == (N, FC), out1.shape
    np.testing.assert_allclose(np.asarray(out1), np.asarray(ref1),
                               rtol=1e-5, atol=1e-5)

    # Case 2: overlapping adaptive bins (C % FC != 0), odd HW=143 (full-extent block).
    N2, C2, H2, W2, FC2 = 3, 10, 13, 11, 4
    x2 = jax.random.normal(k2, (N2, C2, H2, W2), dtype=jnp.float32)
    out2 = jax.block_until_ready(global_ave_pool(x2, FC2))
    ref2 = _reference(x2, FC2)
    assert out2.shape == (N2, FC2), out2.shape
    np.testing.assert_allclose(np.asarray(out2), np.asarray(ref2),
                               rtol=1e-5, atol=1e-5)

    # Case 3: force the multi-step streaming path with a ragged last HW tile
    # (tiny tile budget -> t_hw=128, HW=400 -> 4 steps, last one masked), bf16 in.
    N3, C3, H3, W3, FC3 = 2, 8, 20, 20, 4
    x3 = jax.random.normal(k3, (N3, C3, H3, W3), dtype=jnp.float32).astype(jnp.bfloat16)
    out3 = jax.block_until_ready(global_ave_pool(x3, FC3, target_tile_bytes=2048))
    ref3 = _reference(x3, FC3)
    assert out3.shape == (N3, FC3), out3.shape
    np.testing.assert_allclose(np.asarray(out3, dtype=np.float32),
                               np.asarray(ref3), rtol=1e-2, atol=2e-3)

    print("KERNEL_OK")
</pallas_src>

<mosaic_0001>
module attributes {stable_mosaic.version = 11 : i64} {
  func.func @kernel_single(%arg0: i32, %arg1: memref<2x16x256xf32, #tpu.memory_space<vmem>>, %arg2: memref<16x4xf32, #tpu.memory_space<vmem>>, %arg3: memref<2x4xf32, #tpu.memory_space<vmem>>) attributes {dimension_semantics = [#tpu.dimension_semantics<parallel>], iteration_bounds = array<i64: 1>, scalar_prefetch = 0 : i64, scratch_operands = 0 : i64, tpu.core_type = #tpu.core_type<tc>, window_params = [{transform_indices = @transform_0, window_bounds = array<i64: 2, 16, 256>}, {pipeline_mode = #tpu.pipeline_mode<synchronous>, transform_indices = @transform_1, window_bounds = array<i64: 16, 4>}, {transform_indices = @transform_2, window_bounds = array<i64: 2, 4>}]} {
    %c0 = arith.constant 0 : index
    %c0_0 = arith.constant 0 : index
    %c0_1 = arith.constant 0 : index
    %0 = vector.load %arg1[%c0, %c0_0, %c0_1] : memref<2x16x256xf32, #tpu.memory_space<vmem>>, vector<2x16x256xf32>
    %cst = arith.constant dense<0.000000e+00> : vector<2x16xf32>
    %1 = vector.multi_reduction <add>, %0, %cst [2] : vector<2x16x256xf32> to vector<2x16xf32>
    %c0_2 = arith.constant 0 : index
    %c0_3 = arith.constant 0 : index
    %2 = vector.load %arg2[%c0_2, %c0_3] : memref<16x4xf32, #tpu.memory_space<vmem>>, vector<16x4xf32>
    %cst_4 = arith.constant dense<0.000000e+00> : vector<2x4xf32>
    %3 = tpu.matmul %1, %2, %cst_4 {dimension_numbers = #tpu.dot_dimension_numbers<[1], [0], [0], [1], [0, 0, 1, 1], [], []>} : vector<2x16xf32>, vector<16x4xf32>, vector<2x4xf32> -> vector<2x4xf32>
    %c0_5 = arith.constant 0 : index
    %c0_6 = arith.constant 0 : index
    %4 = vector.load %arg3[%c0_5, %c0_6] : memref<2x4xf32, #tpu.memory_space<vmem>>, vector<2x4xf32>
    tpu.vector_store %arg3[%c0_5, %c0_6], %3 {strides = array<i32>} : memref<2x4xf32, #tpu.memory_space<vmem>>, vector<2x4xf32>,
    return
  }
  func.func @transform_0(%arg0: i32) -> (i32, i32, i32) {
    %c0_i32 = arith.constant 0 : i32
    %c0_i32_0 = arith.constant 0 : i32
    %c0_i32_1 = arith.constant 0 : i32
    return %arg0, %c0_i32, %c0_i32_0 : i32, i32, i32
  }
  func.func @transform_1(%arg0: i32) -> (i32, i32) {
    %c0_i32 = arith.constant 0 : i32
    %c0_i32_0 = arith.constant 0 : i32
    %c0_i32_1 = arith.constant 0 : i32
    return %c0_i32, %c0_i32_0 : i32, i32
  }
  func.func @transform_2(%arg0: i32) -> (i32, i32) {
    %c0_i32 = arith.constant 0 : i32
    %c0_i32_0 = arith.constant 0 : i32
    return %arg0, %c0_i32 : i32, i32
  }
}

</mosaic_0001>

<llo_original>
// kernel: tpu_custom_call.1
$region0: #{tpu_custom_call.1}
  #allocation0 [shape = 'u32[]', space=smem, size = 0x4, offset = 0x4, fixed_abs, tag = 'smem constant byte address 0x4 - core index']
  #allocation1 [shape = 'u32[144,128]{1,0:T(1,128)}', space=vmem, size = 0x12000, scoped, tag = 'internal scratch']
  %s0 = inlined_call_operand.hbm [shape: f32[2,16,256], index: 0, kind: input, shape index: {}]
  %s1 = inlined_call_operand.vmem [shape: f32[16,4], index: 1, kind: input, shape index: {}]
  %s2 = inlined_call_operand.hbm [shape: f32[2,4], index: 2, kind: output, shape index: {}]
  %s3 = sld [smem:[#allocation0]]
  $region22: #{tpu_custom_call.1} parent=0
    _
  %s5 = ssub.s32 1, %s3
  %s6 = scalar_select 0, %s5, %s3
  $region1: #{tpu_custom_call.1} parent=0
    #allocation2 [shape = 'u8[32768]{0}', space=vmem, size = 0x8000, scoped, tag = 'input window, operand 0, single buffered']
    #allocation3 [shape = 's32[1]{0}', space=sflag, size = 0x4, scoped, tag = 'scoped memory for tpu_custom_call.1']
    #allocation4 [shape = 's32[1]{0}', space=sflag, size = 0x4, scoped, tag = 'scoped memory for tpu_custom_call.1']
    #allocation5 [shape = 'u8[1024]{0}', space=vmem, size = 0x400, scoped, tag = 'output window, operand 0, single buffered']
    %7 = vsyncpa [#allocation3], 0
    %8 = vsyncpa [#allocation4], 0
    // Predicated region
    $region2: #{tpu_custom_call.1} parent=1 // pred_check
      _
    $region3: #{tpu_custom_call.1} parent=1 // pred_check_branch
      %10 = sbr.rel (0) target = $region5
    $region4: #{tpu_custom_call.1} parent=1 // pred_region
      %s12 = ssub.s32 1024, 1024
      %13 = vsyncadd [#allocation3], %s12
      %s14 = sshll.u32 [#allocation2], 4
      %s15 = int_to_ptr.vmem [resolvable:$true] %s14
      %20 = dma.hbm_to_vmem [thread:$0]  %s0, 1024, %s15, [#allocation3], 256, 256, 16
    $region5: #{tpu_custom_call.1} parent=1 // pred_fallthru
      _
    // Predicated region
    $region6: #{tpu_custom_call.1} parent=1 // pred_check
      _
    $region7: #{tpu_custom_call.1} parent=1 // pred_check_branch
      %22 = sbr.rel (0) target = $region9
    $region8: #{tpu_custom_call.1} parent=1 // pred_region
      _
    $region9: #{tpu_custom_call.1} parent=1 // pred_fallthru
      _
    // Predicated region
    $region10: #{tpu_custom_call.1} parent=1 // pred_check
      _
    $region11: #{tpu_custom_call.1} parent=1 // pred_check_branch
      %24 = sbr.rel (0) target = $region13
    $region12: #{tpu_custom_call.1} parent=1 // pred_region
      %25 = dma.done [#allocation3], 1024
    $region13: #{tpu_custom_call.1} parent=1 // pred_fallthru
      _
    %v26 = vld [vmem:[#allocation2] sm:$0xff]
    %v27 = vld [vmem:[#allocation2 + $0x8] sm:$0xff]
    %v28 = vld [vmem:[#allocation2 + $0x10] sm:$0xff]
    %v29 = vld [vmem:[#allocation2 + $0x18] sm:$0xff]
    %v30 = vld [vmem:[#allocation2 + $0x20] sm:$0xff]
    %v31 = vld [vmem:[#allocation2 + $0x28] sm:$0xff]
    %v32 = vld [vmem:[#allocation2 + $0x30] sm:$0xff]
    %v33 = vld [vmem:[#allocation2 + $0x38] sm:$0xff]
    %v34 = vadd.f32 %v26, %v27
    %35 = vadd.xlane.f32.xlu0 %v34
    %v36 = vpop.xlane.xlu0 %35
    %v37 = vadd.f32 %v28, %v29
    %38 = vadd.xlane.f32.xlu0 %v37
    %v39 = vpop.xlane.xlu0 %38
    %v40 = vadd.f32 %v30, %v31
    %41 = vadd.xlane.f32.xlu0 %v40
    %v42 = vpop.xlane.xlu0 %41
    %v43 = vadd.f32 %v32, %v33
    %44 = vadd.xlane.f32.xlu0 %v43
    %v45 = vpop.xlane.xlu0 %44
    %v46 = vld [vmem:[%s1] sm:$0xff]
    %v47 = vld [vmem:[%s1 + $0x8] sm:$0xff]
    %v52 = vlaneseq
    %v53 = vand.u32 %v52, 127
    %v54 = vlaneseq
    %v55 = vshrl.u32 %v54, 7
    %v56 = vsub.s32 %v53, %v55
    %v57 = vrot.slane %v36, %v56
    %v58 = vadd.s32 %v53, 4294967288
    %v59 = vlaneseq
    %v60 = vshrl.u32 %v59, 7
    %v61 = vsub.s32 %v58, %v60
    %v62 = vrot.slane %v39, %v61
    %vm63 = vcmask 130112
    %v64 = vsel %vm63, %v62, %v57
    %v65 = vlaneseq
    %v66 = vshrl.u32 %v65, 7
    %v67 = vsub.s32 %v53, %v66
    %v68 = vrot.slane %v42, %v67
    %v69 = vlaneseq
    %v70 = vshrl.u32 %v69, 7
    %v71 = vsub.s32 %v58, %v70
    %v72 = vrot.slane %v45, %v71
    %v73 = vsel %vm63, %v72, %v68
    %vm74 = vcmask 1041409
    %v75 = vsel %vm74, %v73, %v64
    %vm76 = vcmask 130048
    %v77 = vsel %vm76, %v75, 0
    %79 = vmatprep.subr.mxu0 0.0
    %80 = vmatpush1.msra.mxu0 0.0
    %81 = vmatprep.subr.mxu0 0.0
    %82 = vmatpush1.msra.mxu0 0.0
    %83 = vmatprep.subr.mxu0 0.0
    %84 = vmatpush1.msra.mxu0 0.0
    %85 = vmatprep.subr.mxu0 0.0
    %86 = vmatpush1.msra.mxu0 0.0
    %87 = vmatprep.subr.mxu0 0.0
    %88 = vmatpush1.msra.mxu0 0.0
    %89 = vmatprep.subr.mxu0 0.0
    %90 = vmatpush1.msra.mxu0 0.0
    %91 = vmatprep.subr.mxu0 0.0
    %92 = vmatpush1.msra.mxu0 0.0
    %93 = vmatprep.subr.mxu0 0.0
    %94 = vmatpush1.msra.mxu0 0.0
    %95 = vmatprep.subr.mxu0 0.0
    %96 = vmatpush1.msra.mxu0 0.0
    %97 = vmatprep.subr.mxu0 0.0
    %98 = vmatpush1.msra.mxu0 0.0
    %99 = vmatprep.subr.mxu0 0.0
    %100 = vmatpush1.msra.mxu0 0.0
    %101 = vmatprep.subr.mxu0 0.0
    %102 = vmatpush1.msra.mxu0 0.0
    %103 = vmatprep.subr.mxu0 0.0
    %104 = vmatpush1.msra.mxu0 0.0
    %105 = vmatprep.subr.mxu0 0.0
    %106 = vmatpush1.msra.mxu0 0.0
    %107 = vmatprep.subr.mxu0 0.0
    %108 = vmatpush1.msra.mxu0 %v47
    %109 = vmatprep.subr.mxu0 0.0
    %110 = vmatpush1.msra.mxu0 %v46
    %111 = vmatprep.subr.mxu0 0.0
    %112 = vmatpush2.msra.mxu0 0.0
    %113 = vmatprep.subr.mxu0 0.0
    %114 = vmatpush2.msra.mxu0 0.0
    %115 = vmatprep.subr.mxu0 0.0
    %116 = vmatpush2.msra.mxu0 0.0
    %117 = vmatprep.subr.mxu0 0.0
    %118 = vmatpush2.msra.mxu0 0.0
    %119 = vmatprep.subr.mxu0 0.0
    %120 = vmatpush2.msra.mxu0 0.0
    %121 = vmatprep.subr.mxu0 0.0
    %122 = vmatpush2.msra.mxu0 0.0
    %123 = vmatprep.subr.mxu0 0.0
    %124 = vmatpush2.msra.mxu0 0.0
    %125 = vmatprep.subr.mxu0 0.0
    %126 = vmatpush2.msra.mxu0 0.0
    %127 = vmatprep.subr.mxu0 0.0
    %128 = vmatpush2.msra.mxu0 0.0
    %129 = vmatprep.subr.mxu0 0.0
    %130 = vmatpush2.msra.mxu0 0.0
    %131 = vmatprep.subr.mxu0 0.0
    %132 = vmatpush2.msra.mxu0 0.0
    %133 = vmatprep.subr.mxu0 0.0
    %134 = vmatpush2.msra.mxu0 0.0
    %135 = vmatprep.subr.mxu0 0.0
    %136 = vmatpush2.msra.mxu0 0.0
    %137 = vmatprep.subr.mxu0 0.0
    %138 = vmatpush2.msra.mxu0 0.0
    %139 = vmatprep.subr.mxu0 0.0
    %140 = vmatpush2.msra.mxu0 0.0
    %141 = vmatprep.subr.mxu0 0.0
    %142 = vmatpush2.msra.mxu0 0.0
    %143 = vmatprep.mubr.f32.mxu0 0.0
    %144 = vmatmul.mubr.f32.gmra.mxu0 %v77
    %v145 = vpop.f32.mrf.mxu0
    %v146 = vadd.f32 0.0, %v145
    %v147 = vpop.f32.mrf.mxu0
    %148 = vdwg.mxu0
    %vm149 = vcmask 25600
    %150 = vst.msk [vmem:[#allocation5] sm:$0x3] %vm149, %v146
    // Predicated region
    $region14: #{tpu_custom_call.1} parent=1 // pred_check
      _
    $region15: #{tpu_custom_call.1} parent=1 // pred_check_branch
      %152 = sbr.rel (0) target = $region17
    $region16: #{tpu_custom_call.1} parent=1 // pred_region
      %s154 = ssub.s32 32, 32
      %155 = vsyncadd [#allocation4], %s154
      %s157 = sshll.u32 [#allocation5], 4
      %s158 = int_to_ptr.vmem [resolvable:$true] %s157
      %160 = dma.vmem_to_hbm [thread:$0]  %s158, 32, %s2, [#allocation4]
    $region17: #{tpu_custom_call.1} parent=1 // pred_fallthru
      _
    // Predicated region
    $region18: #{tpu_custom_call.1} parent=1 // pred_check
      _
    $region19: #{tpu_custom_call.1} parent=1 // pred_check_branch
      %162 = sbr.rel (0) target = $region21
    $region20: #{tpu_custom_call.1} parent=1 // pred_region
      %163 = dma.done [#allocation4], 32
    $region21: #{tpu_custom_call.1} parent=1 // pred_fallthru
      _
    %164 = vsyncpa [#allocation3], 1
    %165 = vsyncpa [#allocation4], 1

</llo_original>
